<compile_context>
chip_gen: v7x
topology: tpu7x:2x2x1
jax: 0.10.0
libtpu: 0.0.40
codegen_flags: <defaults>
</compile_context>

<pallas_src>
import functools

import jax
import jax.numpy as jnp
from jax.experimental import pallas as pl
from jax.experimental.pallas import tpu as pltpu

HIDDEN1 = 25
HIDDEN2 = 15
LANE_PAD = 128          # padded lane width for the hidden dims (VMEM-only)
TM_DEFAULT = 2048       # batch tile (rows); multiple of 8, sweepable


def _round_up(n, m):
    return ((n + m - 1) // m) * m


def _cdiv(a, b):
    return (a + b - 1) // b


def mlp_kernel(x_ref, w1_ref, b1_ref, w2_ref, b2_ref, w3_ref, b3_ref, o_ref):
    x = x_ref[...]
    # Layer 1: Linear + ReLU (padded w/b lanes are zero -> relu(0) = 0).
    h1 = jnp.dot(x, w1_ref[...], preferred_element_type=jnp.float32) + b1_ref[...]
    h1 = jnp.maximum(h1, 0.0)
    # Layer 2: Linear + ReLU.
    h2 = jnp.dot(h1, w2_ref[...], preferred_element_type=jnp.float32) + b2_ref[...]
    h2 = jnp.maximum(h2, 0.0)
    # Layer 3: Linear (logits, no activation). w3/b3 keep true output width,
    # so the store is exactly (tm, num_classes) — minimal HBM writeback.
    logits = jnp.dot(h2, w3_ref[...], preferred_element_type=jnp.float32) + b3_ref[...]
    o_ref[...] = logits.astype(o_ref.dtype)


def init_params(key, num_features, num_classes):
    """PyTorch-Linear-style init (U(-1/sqrt(fan_in), +1/sqrt(fan_in))).
    Weights stored as (in, out) — transposed relative to torch's (out, in)."""
    dims = [(num_features, HIDDEN1), (HIDDEN1, HIDDEN2), (HIDDEN2, num_classes)]
    params = {}
    for idx, (fan_in, fan_out) in enumerate(dims, start=1):
        key, kw, kb = jax.random.split(key, 3)
        bound = 1.0 / jnp.sqrt(float(fan_in))
        params[f"w{idx}"] = jax.random.uniform(
            kw, (fan_in, fan_out), jnp.float32, minval=-bound, maxval=bound)
        params[f"b{idx}"] = jax.random.uniform(
            kb, (1, fan_out), jnp.float32, minval=-bound, maxval=bound)
    return params


def pad_params(params, num_features, num_classes, pad=LANE_PAD):
    """Zero-pad the HIDDEN dims to `pad` lanes (lane-dense VMEM compute).
    The last layer keeps its true output width so the kernel's output block is
    un-padded.  Call ONCE and reuse the result across calls."""
    assert HIDDEN1 <= pad and HIDDEN2 <= pad, "hidden dims must fit in LANE_PAD"
    w1 = jnp.zeros((num_features, pad), jnp.float32).at[:, :HIDDEN1].set(params["w1"])
    b1 = jnp.zeros((1, pad), jnp.float32).at[:, :HIDDEN1].set(params["b1"])
    w2 = jnp.zeros((pad, pad), jnp.float32).at[:HIDDEN1, :HIDDEN2].set(params["w2"])
    b2 = jnp.zeros((1, pad), jnp.float32).at[:, :HIDDEN2].set(params["b2"])
    w3 = jnp.zeros((pad, num_classes), jnp.float32).at[:HIDDEN2, :].set(params["w3"])
    b3 = params["b3"].astype(jnp.float32)
    return w1, b1, w2, b2, w3, b3


def _choose_tile(batch, block_m):
    """Row tile: whole batch if it fits in one block (block == full array dim,
    so no (8,128) issue and no tail block).  Otherwise a multiple-of-8 tile
    chosen so the number of grid steps is even (balanced across v7x's 2 TCs)."""
    if batch <= block_m:
        return batch
    tm = block_m
    steps = _cdiv(batch, tm)
    if steps % 2 == 1:
        steps += 1
        tm = _round_up(_cdiv(batch, steps), 8)
    return tm


def pallas_mlp(x, padded_params, *, block_m=TM_DEFAULT):
    """x: (B, num_features) f32 -> logits (B, num_classes) f32."""
    w1, b1, w2, b2, w3, b3 = padded_params
    B, F = x.shape
    C = w3.shape[1]

    tm = _choose_tile(B, block_m)
    grid = (_cdiv(B, tm),)

    cost = pl.CostEstimate(
        flops=2 * B * (F * HIDDEN1 + HIDDEN1 * HIDDEN2 + HIDDEN2 * C),
        transcendentals=0,
        # Actually-transferred bytes (padded weights, un-padded x / logits).
        bytes_accessed=4 * (B * F + B * C
                            + F * LANE_PAD + LANE_PAD
                            + LANE_PAD * LANE_PAD + LANE_PAD
                            + LANE_PAD * C + C),
    )

    const2d = lambda i: (0, 0)   # weights / biases stay VMEM-resident across steps
    return pl.pallas_call(
        mlp_kernel,
        out_shape=jax.ShapeDtypeStruct((B, C), jnp.float32),
        grid=grid,
        in_specs=[
            pl.BlockSpec((tm, F), lambda i: (i, 0)),          # x row-block (pipelined)
            pl.BlockSpec((F, LANE_PAD), const2d),             # w1
            pl.BlockSpec((1, LANE_PAD), const2d),             # b1
            pl.BlockSpec((LANE_PAD, LANE_PAD), const2d),      # w2
            pl.BlockSpec((1, LANE_PAD), const2d),             # b2
            pl.BlockSpec((LANE_PAD, C), const2d),             # w3 (true output width)
            pl.BlockSpec((1, C), const2d),                    # b3
        ],
        out_specs=pl.BlockSpec((tm, C), lambda i: (i, 0)),    # un-padded logits block
        compiler_params=pltpu.CompilerParams(
            dimension_semantics=("parallel",),
        ),
        cost_estimate=cost,
    )(x, w1, b1, w2, b2, w3, b3)


# Jitted entry point; padded params are passed in (padded once, reused).
mlp_jit = jax.jit(pallas_mlp, static_argnames=("block_m",))


def reference_mlp(x, params):
    h1 = jnp.maximum(x @ params["w1"] + params["b1"], 0.0)
    h2 = jnp.maximum(h1 @ params["w2"] + params["b2"], 0.0)
    return h2 @ params["w3"] + params["b3"]


if __name__ == "__main__":
    num_features = 32
    num_classes = 4

    key = jax.random.PRNGKey(0)
    key, kp = jax.random.split(key)
    params = init_params(kp, num_features, num_classes)
    padded = pad_params(params, num_features, num_classes)   # built once, reused

    # Small smoke test: single full block (grid = 1, no padding anywhere).
    key, kx = jax.random.split(key)
    x_small = jax.random.normal(kx, (8, num_features), dtype=jnp.float32)
    out_small = jax.block_until_ready(mlp_jit(x_small, padded))
    ref_small = reference_mlp(x_small, params)
    assert out_small.shape == (8, num_classes)
    assert jnp.allclose(out_small, ref_small, atol=1e-5, rtol=1e-5), \
        "small-batch mismatch vs JAX reference"

    # Multi-step grid with a partial tail block and an even step count:
    # exercises Pallas' implicit tail masking (no wrapper jnp.pad) and the
    # v7x-friendly even grid split.  block_m lowered so the grid has >1 step
    # even at this small test size.
    key, kx2 = jax.random.split(key)
    x_big = jax.random.normal(kx2, (1027, num_features), dtype=jnp.float32)
    out_big = jax.block_until_ready(mlp_jit(x_big, padded, block_m=256))
    ref_big = reference_mlp(x_big, params)
    assert out_big.shape == (1027, num_classes)
    assert jnp.allclose(out_big, ref_big, atol=1e-5, rtol=1e-5), \
        "large-batch mismatch vs JAX reference"

    print("KERNEL_OK")
</pallas_src>

<mosaic_0001>
module attributes {stable_mosaic.version = 11 : i64} {
  func.func @mlp_kernel(%arg0: i32, %arg1: memref<8x32xf32, #tpu.memory_space<vmem>>, %arg2: memref<32x128xf32, #tpu.memory_space<vmem>>, %arg3: memref<1x128xf32, #tpu.memory_space<vmem>>, %arg4: memref<128x128xf32, #tpu.memory_space<vmem>>, %arg5: memref<1x128xf32, #tpu.memory_space<vmem>>, %arg6: memref<128x4xf32, #tpu.memory_space<vmem>>, %arg7: memref<1x4xf32, #tpu.memory_space<vmem>>, %arg8: memref<8x4xf32, #tpu.memory_space<vmem>>) attributes {dimension_semantics = [#tpu.dimension_semantics<parallel>], iteration_bounds = array<i64: 1>, scalar_prefetch = 0 : i64, scratch_operands = 0 : i64, tpu.core_type = #tpu.core_type<tc>, window_params = [{transform_indices = @transform_0, window_bounds = array<i64: 8, 32>}, {pipeline_mode = #tpu.pipeline_mode<synchronous>, transform_indices = @transform_1, window_bounds = array<i64: 32, 128>}, {pipeline_mode = #tpu.pipeline_mode<synchronous>, transform_indices = @transform_2, window_bounds = array<i64: 1, 128>}, {pipeline_mode = #tpu.pipeline_mode<synchronous>, transform_indices = @transform_3, window_bounds = array<i64: 128, 128>}, {pipeline_mode = #tpu.pipeline_mode<synchronous>, transform_indices = @transform_4, window_bounds = array<i64: 1, 128>}, {pipeline_mode = #tpu.pipeline_mode<synchronous>, transform_indices = @transform_5, window_bounds = array<i64: 128, 4>}, {pipeline_mode = #tpu.pipeline_mode<synchronous>, transform_indices = @transform_6, window_bounds = array<i64: 1, 4>}, {transform_indices = @transform_7, window_bounds = array<i64: 8, 4>}]} {
    %c0 = arith.constant 0 : index
    %c0_0 = arith.constant 0 : index
    %0 = vector.load %arg1[%c0, %c0_0] : memref<8x32xf32, #tpu.memory_space<vmem>>, vector<8x32xf32>
    %c0_1 = arith.constant 0 : index
    %c0_2 = arith.constant 0 : index
    %1 = vector.load %arg2[%c0_1, %c0_2] : memref<32x128xf32, #tpu.memory_space<vmem>>, vector<32x128xf32>
    %cst = arith.constant dense<0.000000e+00> : vector<8x128xf32>
    %2 = tpu.matmul %0, %1, %cst {dimension_numbers = #tpu.dot_dimension_numbers<[1], [0], [0], [1], [0, 0, 1, 1], [], []>} : vector<8x32xf32>, vector<32x128xf32>, vector<8x128xf32> -> vector<8x128xf32>
    %c0_3 = arith.constant 0 : index
    %c0_4 = arith.constant 0 : index
    %3 = vector.load %arg3[%c0_3, %c0_4] : memref<1x128xf32, #tpu.memory_space<vmem>>, vector<1x128xf32>
    %4 = vector.broadcast %3 : vector<1x128xf32> to vector<8x128xf32>
    %5 = arith.addf %2, %4 : vector<8x128xf32>
    %cst_5 = arith.constant 0.000000e+00 : f32
    %6 = vector.broadcast %cst_5 : f32 to vector<8x128xf32>
    %7 = arith.maximumf %5, %6 : vector<8x128xf32>
    %c0_6 = arith.constant 0 : index
    %c0_7 = arith.constant 0 : index
    %8 = vector.load %arg4[%c0_6, %c0_7] : memref<128x128xf32, #tpu.memory_space<vmem>>, vector<128x128xf32>
    %cst_8 = arith.constant dense<0.000000e+00> : vector<8x128xf32>
    %9 = tpu.matmul %7, %8, %cst_8 {dimension_numbers = #tpu.dot_dimension_numbers<[1], [0], [0], [1], [0, 0, 1, 1], [], []>} : vector<8x128xf32>, vector<128x128xf32>, vector<8x128xf32> -> vector<8x128xf32>
    %c0_9 = arith.constant 0 : index
    %c0_10 = arith.constant 0 : index
    %10 = vector.load %arg5[%c0_9, %c0_10] : memref<1x128xf32, #tpu.memory_space<vmem>>, vector<1x128xf32>
    %11 = vector.broadcast %10 : vector<1x128xf32> to vector<8x128xf32>
    %12 = arith.addf %9, %11 : vector<8x128xf32>
    %cst_11 = arith.constant 0.000000e+00 : f32
    %13 = vector.broadcast %cst_11 : f32 to vector<8x128xf32>
    %14 = arith.maximumf %12, %13 : vector<8x128xf32>
    %c0_12 = arith.constant 0 : index
    %c0_13 = arith.constant 0 : index
    %15 = vector.load %arg6[%c0_12, %c0_13] : memref<128x4xf32, #tpu.memory_space<vmem>>, vector<128x4xf32>
    %cst_14 = arith.constant dense<0.000000e+00> : vector<8x4xf32>
    %16 = tpu.matmul %14, %15, %cst_14 {dimension_numbers = #tpu.dot_dimension_numbers<[1], [0], [0], [1], [0, 0, 1, 1], [], []>} : vector<8x128xf32>, vector<128x4xf32>, vector<8x4xf32> -> vector<8x4xf32>
    %c0_15 = arith.constant 0 : index
    %c0_16 = arith.constant 0 : index
    %17 = vector.load %arg7[%c0_15, %c0_16] : memref<1x4xf32, #tpu.memory_space<vmem>>, vector<1x4xf32>
    %18 = vector.broadcast %17 : vector<1x4xf32> to vector<8x4xf32>
    %19 = arith.addf %16, %18 : vector<8x4xf32>
    %c0_17 = arith.constant 0 : index
    %c0_18 = arith.constant 0 : index
    %20 = vector.load %arg8[%c0_17, %c0_18] : memref<8x4xf32, #tpu.memory_space<vmem>>, vector<8x4xf32>
    tpu.vector_store %arg8[%c0_17, %c0_18], %19 {strides = array<i32>} : memref<8x4xf32, #tpu.memory_space<vmem>>, vector<8x4xf32>,
    return
  }
  func.func @transform_0(%arg0: i32) -> (i32, i32) {
    %c0_i32 = arith.constant 0 : i32
    %c0_i32_0 = arith.constant 0 : i32
    return %arg0, %c0_i32 : i32, i32
  }
  func.func @transform_1(%arg0: i32) -> (i32, i32) {
    %c0_i32 = arith.constant 0 : i32
    %c0_i32_0 = arith.constant 0 : i32
    %c0_i32_1 = arith.constant 0 : i32
    return %c0_i32, %c0_i32_0 : i32, i32
  }
  func.func @transform_2(%arg0: i32) -> (i32, i32) {
    %c0_i32 = arith.constant 0 : i32
    %c0_i32_0 = arith.constant 0 : i32
    %c0_i32_1 = arith.constant 0 : i32
    return %c0_i32, %c0_i32_0 : i32, i32
  }
  func.func @transform_3(%arg0: i32) -> (i32, i32) {
    %c0_i32 = arith.constant 0 : i32
    %c0_i32_0 = arith.constant 0 : i32
    %c0_i32_1 = arith.constant 0 : i32
    return %c0_i32, %c0_i32_0 : i32, i32
  }
  func.func @transform_4(%arg0: i32) -> (i32, i32) {
    %c0_i32 = arith.constant 0 : i32
    %c0_i32_0 = arith.constant 0 : i32
    %c0_i32_1 = arith.constant 0 : i32
    return %c0_i32, %c0_i32_0 : i32, i32
  }
  func.func @transform_5(%arg0: i32) -> (i32, i32) {
    %c0_i32 = arith.constant 0 : i32
    %c0_i32_0 = arith.constant 0 : i32
    %c0_i32_1 = arith.constant 0 : i32
    return %c0_i32, %c0_i32_0 : i32, i32
  }
  func.func @transform_6(%arg0: i32) -> (i32, i32) {
    %c0_i32 = arith.constant 0 : i32
    %c0_i32_0 = arith.constant 0 : i32
    %c0_i32_1 = arith.constant 0 : i32
    return %c0_i32, %c0_i32_0 : i32, i32
  }
  func.func @transform_7(%arg0: i32) -> (i32, i32) {
    %c0_i32 = arith.constant 0 : i32
    %c0_i32_0 = arith.constant 0 : i32
    return %arg0, %c0_i32 : i32, i32
  }
}

</mosaic_0001>

<llo_original>
// kernel: pallas_mlp.1
$region0: #{pallas_mlp.1}
  #allocation0 [shape = 'u32[]', space=smem, size = 0x4, offset = 0x4, fixed_abs, tag = 'smem constant byte address 0x4 - core index']
  #allocation1 [shape = 'u32[144,128]{1,0:T(1,128)}', space=vmem, size = 0x12000, scoped, tag = 'internal scratch']
  %s0 = inlined_call_operand.vmem [shape: f32[8,32], index: 0, kind: input, shape index: {}]
  %s1 = inlined_call_operand.hbm [shape: f32[32,128], index: 1, kind: input, shape index: {}]
  %s2 = inlined_call_operand.vmem [shape: f32[1,128], index: 2, kind: input, shape index: {}]
  %s3 = inlined_call_operand.vmem [shape: f32[128,128], index: 3, kind: input, shape index: {}]
  %s4 = inlined_call_operand.vmem [shape: f32[1,128], index: 4, kind: input, shape index: {}]
  %s5 = inlined_call_operand.vmem [shape: f32[128,4], index: 5, kind: input, shape index: {}]
  %s6 = inlined_call_operand.vmem [shape: f32[1,4], index: 6, kind: input, shape index: {}]
  %s7 = inlined_call_operand.vmem [shape: f32[8,4], index: 7, kind: output, shape index: {}]
  %s8 = sld [smem:[#allocation0]]
  $region42: #{pallas_mlp.1} parent=0
    _
  %s10 = ssub.s32 1, %s8
  %s11 = scalar_select 0, %s10, %s8
  $region1: #{pallas_mlp.1} parent=0
    #allocation2 [shape = 'u8[16384]{0}', space=vmem, size = 0x4000, scoped, tag = 'input window, operand 1, single buffered']
    #allocation3 [shape = 's32[1]{0}', space=sflag, size = 0x4, scoped, tag = 'scoped memory for pallas_mlp.1']
    %12 = vsyncpa [#allocation3], 0
    // Predicated region
    $region2: #{pallas_mlp.1} parent=1 // pred_check
      _
    $region3: #{pallas_mlp.1} parent=1 // pred_check_branch
      %14 = sbr.rel (0) target = $region5
    $region4: #{pallas_mlp.1} parent=1 // pred_region
      _
    $region5: #{pallas_mlp.1} parent=1 // pred_fallthru
      _
    // Predicated region
    $region6: #{pallas_mlp.1} parent=1 // pred_check
      _
    $region7: #{pallas_mlp.1} parent=1 // pred_check_branch
      %16 = sbr.rel (0) target = $region9
    $region8: #{pallas_mlp.1} parent=1 // pred_region
      %s18 = ssub.s32 512, 512
      %19 = vsyncadd [#allocation3], %s18
      %s20 = sshll.u32 [#allocation2], 4
      %s21 = int_to_ptr.vmem [resolvable:$true] %s20
      %26 = dma.hbm_to_vmem [thread:$0]  %s1, 512, %s21, [#allocation3], 128, 128, 8
    $region9: #{pallas_mlp.1} parent=1 // pred_fallthru
      _
    // Predicated region
    $region10: #{pallas_mlp.1} parent=1 // pred_check
      _
    $region11: #{pallas_mlp.1} parent=1 // pred_check_branch
      %28 = sbr.rel (0) target = $region13
    $region12: #{pallas_mlp.1} parent=1 // pred_region
      _
    $region13: #{pallas_mlp.1} parent=1 // pred_fallthru
      _
    // Predicated region
    $region14: #{pallas_mlp.1} parent=1 // pred_check
      _
    $region15: #{pallas_mlp.1} parent=1 // pred_check_branch
      %30 = sbr.rel (0) target = $region17
    $region16: #{pallas_mlp.1} parent=1 // pred_region
      _
    $region17: #{pallas_mlp.1} parent=1 // pred_fallthru
      _
    // Predicated region
    $region18: #{pallas_mlp.1} parent=1 // pred_check
      _
    $region19: #{pallas_mlp.1} parent=1 // pred_check_branch
      %32 = sbr.rel (0) target = $region21
    $region20: #{pallas_mlp.1} parent=1 // pred_region
      _
    $region21: #{pallas_mlp.1} parent=1 // pred_fallthru
      _
    // Predicated region
    $region22: #{pallas_mlp.1} parent=1 // pred_check
      _
    $region23: #{pallas_mlp.1} parent=1 // pred_check_branch
      %34 = sbr.rel (0) target = $region25
    $region24: #{pallas_mlp.1} parent=1 // pred_region
      _
    $region25: #{pallas_mlp.1} parent=1 // pred_fallthru
      _
    // Predicated region
    $region26: #{pallas_mlp.1} parent=1 // pred_check
      _
    $region27: #{pallas_mlp.1} parent=1 // pred_check_branch
      %36 = sbr.rel (0) target = $region29
    $region28: #{pallas_mlp.1} parent=1 // pred_region
      _
    $region29: #{pallas_mlp.1} parent=1 // pred_fallthru
      _
    // Predicated region
    $region30: #{pallas_mlp.1} parent=1 // pred_check
      _
    $region31: #{pallas_mlp.1} parent=1 // pred_check_branch
      %38 = sbr.rel (0) target = $region33
    $region32: #{pallas_mlp.1} parent=1 // pred_region
      %39 = dma.done [#allocation3], 512
    $region33: #{pallas_mlp.1} parent=1 // pred_fallthru
      _
    %v40 = vld [vmem:[%s0] sm:$0xff]
    %v41 = vld [vmem:[#allocation2] sm:$0xff]
    %v42 = vld [vmem:[#allocation2 + $0x8] sm:$0xff]
    %v43 = vld [vmem:[#allocation2 + $0x10] sm:$0xff]
    %v44 = vld [vmem:[#allocation2 + $0x18] sm:$0xff]
    %v45 = vld [vmem:[%s2] sm:$0x1]
    %v47 = vlaneseq
    %v48 = vshrl.u32 %v47, 7
    %v49 = vsub.s32 0, %v48
    %v50 = vrot.slane %v45, %v49
    %vm52 = vcmask 261120
    %v54 = vsel %vm52, %v40, 0
    %56 = vmatprep.subr.mxu0 0.0
    %57 = vmatpush1.msra.mxu0 %v41
    %58 = vmatprep.subr.mxu0 0.0
    %59 = vmatpush1.msra.mxu0 %v42
    %60 = vmatprep.subr.mxu0 0.0
    %61 = vmatpush1.msra.mxu0 %v43
    %62 = vmatprep.subr.mxu0 0.0
    %63 = vmatpush1.msra.mxu0 %v44
    %64 = vmatprep.subr.mxu0 0.0
    %65 = vmatpush1.msra.mxu0 0.0
    %66 = vmatprep.subr.mxu0 0.0
    %67 = vmatpush1.msra.mxu0 0.0
    %68 = vmatprep.subr.mxu0 0.0
    %69 = vmatpush1.msra.mxu0 0.0
    %70 = vmatprep.subr.mxu0 0.0
    %71 = vmatpush1.msra.mxu0 0.0
    %72 = vmatprep.subr.mxu0 0.0
    %73 = vmatpush1.msra.mxu0 0.0
    %74 = vmatprep.subr.mxu0 0.0
    %75 = vmatpush1.msra.mxu0 0.0
    %76 = vmatprep.subr.mxu0 0.0
    %77 = vmatpush1.msra.mxu0 0.0
    %78 = vmatprep.subr.mxu0 0.0
    %79 = vmatpush1.msra.mxu0 0.0
    %80 = vmatprep.subr.mxu0 0.0
    %81 = vmatpush1.msra.mxu0 0.0
    %82 = vmatprep.subr.mxu0 0.0
    %83 = vmatpush1.msra.mxu0 0.0
    %84 = vmatprep.subr.mxu0 0.0
    %85 = vmatpush1.msra.mxu0 0.0
    %86 = vmatprep.subr.mxu0 0.0
    %87 = vmatpush1.msra.mxu0 0.0
    %88 = vmatprep.subr.mxu0 0.0
    %89 = vmatpush1.msra.mxu0 0.0
    %90 = vmatprep.subr.mxu0 0.0
    %91 = vmatpush1.msra.mxu0 0.0
    %92 = vmatprep.subr.mxu0 0.0
    %93 = vmatpush1.msra.mxu0 0.0
    %94 = vmatprep.subr.mxu0 0.0
    %95 = vmatpush1.msra.mxu0 0.0
    %96 = vmatprep.subr.mxu0 0.0
    %97 = vmatpush1.msra.mxu0 0.0
    %98 = vmatprep.subr.mxu0 0.0
    %99 = vmatpush1.msra.mxu0 0.0
    %100 = vmatprep.subr.mxu0 0.0
    %101 = vmatpush1.msra.mxu0 0.0
    %102 = vmatprep.subr.mxu0 0.0
    %103 = vmatpush1.msra.mxu0 0.0
    %104 = vmatprep.subr.mxu0 0.0
    %105 = vmatpush1.msra.mxu0 0.0
    %106 = vmatprep.subr.mxu0 0.0
    %107 = vmatpush1.msra.mxu0 0.0
    %108 = vmatprep.subr.mxu0 0.0
    %109 = vmatpush1.msra.mxu0 0.0
    %110 = vmatprep.subr.mxu0 0.0
    %111 = vmatpush1.msra.mxu0 0.0
    %112 = vmatprep.subr.mxu0 0.0
    %113 = vmatpush1.msra.mxu0 0.0
    %114 = vmatprep.subr.mxu0 0.0
    %115 = vmatpush1.msra.mxu0 0.0
    %116 = vmatprep.subr.mxu0 0.0
    %117 = vmatpush1.msra.mxu0 0.0
    %118 = vmatprep.subr.mxu0 0.0
    %119 = vmatpush1.msra.mxu0 0.0
    %120 = vmatprep.mubr.f32.mxu0 0.0
    %121 = vmatmul.mubr.f32.gmra.mrb[0].mxu0 %v54
    %v122 = vpop.f32.mrb[0].mxu0
    %v123 = vadd.f32 %v50, %v122
    %v124 = vpop.f32.mrb[0].mxu0
    %125 = vdwg.mxu0
    %v126 = vmax.f32 %v123, 0.0
    %v127 = vld [vmem:[%s3] sm:$0xff]
    %v128 = vld [vmem:[%s3 + $0x8] sm:$0xff]
    %v129 = vld [vmem:[%s3 + $0x10] sm:$0xff]
    %v130 = vld [vmem:[%s3 + $0x18] sm:$0xff]
    %v131 = vld [vmem:[%s3 + $0x20] sm:$0xff]
    %v132 = vld [vmem:[%s3 + $0x28] sm:$0xff]
    %v133 = vld [vmem:[%s3 + $0x30] sm:$0xff]
    %v134 = vld [vmem:[%s3 + $0x38] sm:$0xff]
    %v135 = vld [vmem:[%s3 + $0x40] sm:$0xff]
    %v136 = vld [vmem:[%s3 + $0x48] sm:$0xff]
    %v137 = vld [vmem:[%s3 + $0x50] sm:$0xff]
    %v138 = vld [vmem:[%s3 + $0x58] sm:$0xff]
    %v139 = vld [vmem:[%s3 + $0x60] sm:$0xff]
    %v140 = vld [vmem:[%s3 + $0x68] sm:$0xff]
    %v141 = vld [vmem:[%s3 + $0x70] sm:$0xff]
    %v142 = vld [vmem:[%s3 + $0x78] sm:$0xff]
    %v143 = vld [vmem:[%s4] sm:$0x1]
    %v145 = vlaneseq
    %v146 = vshrl.u32 %v145, 7
    %v147 = vsub.s32 0, %v146
    %v148 = vrot.slane %v143, %v147
    %150 = vmatprep.subr.mxu0 0.0
    %151 = vmatpush1.msra.mxu0 %v127
    %152 = vmatprep.subr.mxu0 0.0
    %153 = vmatpush1.msra.mxu0 %v128
    %154 = vmatprep.subr.mxu0 0.0
    %155 = vmatpush1.msra.mxu0 %v129
    %156 = vmatprep.subr.mxu0 0.0
    %157 = vmatpush1.msra.mxu0 %v130
    %158 = vmatprep.subr.mxu0 0.0
    %159 = vmatpush1.msra.mxu0 %v131
    %160 = vmatprep.subr.mxu0 0.0
    %161 = vmatpush1.msra.mxu0 %v132
    %162 = vmatprep.subr.mxu0 0.0
    %163 = vmatpush1.msra.mxu0 %v133
    %164 = vmatprep.subr.mxu0 0.0
    %165 = vmatpush1.msra.mxu0 %v134
    %166 = vmatprep.subr.mxu0 0.0
    %167 = vmatpush1.msra.mxu0 %v135
    %168 = vmatprep.subr.mxu0 0.0
    %169 = vmatpush1.msra.mxu0 %v136
    %170 = vmatprep.subr.mxu0 0.0
    %171 = vmatpush1.msra.mxu0 %v137
    %172 = vmatprep.subr.mxu0 0.0
    %173 = vmatpush1.msra.mxu0 %v138
    %174 = vmatprep.subr.mxu0 0.0
    %175 = vmatpush1.msra.mxu0 %v139
    %176 = vmatprep.subr.mxu0 0.0
    %177 = vmatpush1.msra.mxu0 %v140
    %178 = vmatprep.subr.mxu0 0.0
    %179 = vmatpush1.msra.mxu0 %v141
    %180 = vmatprep.subr.mxu0 0.0
    %181 = vmatpush1.msra.mxu0 %v142
    %182 = vmatprep.subr.mxu0 0.0
    %183 = vmatpush1.msra.mxu0 0.0
    %184 = vmatprep.subr.mxu0 0.0
    %185 = vmatpush1.msra.mxu0 0.0
    %186 = vmatprep.subr.mxu0 0.0
    %187 = vmatpush1.msra.mxu0 0.0
    %188 = vmatprep.subr.mxu0 0.0
    %189 = vmatpush1.msra.mxu0 0.0
    %190 = vmatprep.subr.mxu0 0.0
    %191 = vmatpush1.msra.mxu0 0.0
    %192 = vmatprep.subr.mxu0 0.0
    %193 = vmatpush1.msra.mxu0 0.0
    %194 = vmatprep.subr.mxu0 0.0
    %195 = vmatpush1.msra.mxu0 0.0
    %196 = vmatprep.subr.mxu0 0.0
    %197 = vmatpush1.msra.mxu0 0.0
    %198 = vmatprep.subr.mxu0 0.0
    %199 = vmatpush1.msra.mxu0 0.0
    %200 = vmatprep.subr.mxu0 0.0
    %201 = vmatpush1.msra.mxu0 0.0
    %202 = vmatprep.subr.mxu0 0.0
    %203 = vmatpush1.msra.mxu0 0.0
    %204 = vmatprep.subr.mxu0 0.0
    %205 = vmatpush1.msra.mxu0 0.0
    %206 = vmatprep.subr.mxu0 0.0
    %207 = vmatpush1.msra.mxu0 0.0
    %208 = vmatprep.subr.mxu0 0.0
    %209 = vmatpush1.msra.mxu0 0.0
    %210 = vmatprep.subr.mxu0 0.0
    %211 = vmatpush1.msra.mxu0 0.0
    %212 = vmatprep.subr.mxu0 0.0
    %213 = vmatpush1.msra.mxu0 0.0
    %214 = vmatprep.mubr.f32.mxu0 0.0
    %215 = vmatmul.mubr.f32.gmra.mrb[0].mxu0 %v126
    %v216 = vpop.f32.mrb[0].mxu0
    %v217 = vadd.f32 %v148, %v216
    %v218 = vpop.f32.mrb[0].mxu0
    %219 = vdwg.mxu0
    %v220 = vmax.f32 %v217, 0.0
    %v221 = vld [vmem:[%s5] sm:$0xff]
    %v222 = vld [vmem:[%s5 + $0x8] sm:$0xff]
    %v223 = vld [vmem:[%s5 + $0x10] sm:$0xff]
    %v224 = vld [vmem:[%s5 + $0x18] sm:$0xff]
    %v225 = vld [vmem:[%s5 + $0x20] sm:$0xff]
    %v226 = vld [vmem:[%s5 + $0x28] sm:$0xff]
    %v227 = vld [vmem:[%s5 + $0x30] sm:$0xff]
    %v228 = vld [vmem:[%s5 + $0x38] sm:$0xff]
    %v229 = vld [vmem:[%s5 + $0x40] sm:$0xff]
    %v230 = vld [vmem:[%s5 + $0x48] sm:$0xff]
    %v231 = vld [vmem:[%s5 + $0x50] sm:$0xff]
    %v232 = vld [vmem:[%s5 + $0x58] sm:$0xff]
    %v233 = vld [vmem:[%s5 + $0x60] sm:$0xff]
    %v234 = vld [vmem:[%s5 + $0x68] sm:$0xff]
    %v235 = vld [vmem:[%s5 + $0x70] sm:$0xff]
    %v236 = vld [vmem:[%s5 + $0x78] sm:$0xff]
    %v237 = vld [vmem:[%s6] sm:$0x1]
    %v239 = vlaneseq
    %v240 = vshrl.u32 %v239, 7
    %v241 = vsub.s32 0, %v240
    %v242 = vrot.slane %v237, %v241
    %244 = vmatprep.subr.mxu0 0.0
    %245 = vmatpush1.msra.mxu0 %v221
    %246 = vmatprep.subr.mxu0 0.0
    %247 = vmatpush1.msra.mxu0 %v222
    %248 = vmatprep.subr.mxu0 0.0
    %249 = vmatpush1.msra.mxu0 %v223
    %250 = vmatprep.subr.mxu0 0.0
    %251 = vmatpush1.msra.mxu0 %v224
    %252 = vmatprep.subr.mxu0 0.0
    %253 = vmatpush1.msra.mxu0 %v225
    %254 = vmatprep.subr.mxu0 0.0
    %255 = vmatpush1.msra.mxu0 %v226
    %256 = vmatprep.subr.mxu0 0.0
    %257 = vmatpush1.msra.mxu0 %v227
    %258 = vmatprep.subr.mxu0 0.0
    %259 = vmatpush1.msra.mxu0 %v228
    %260 = vmatprep.subr.mxu0 0.0
    %261 = vmatpush1.msra.mxu0 %v229
    %262 = vmatprep.subr.mxu0 0.0
    %263 = vmatpush1.msra.mxu0 %v230
    %264 = vmatprep.subr.mxu0 0.0
    %265 = vmatpush1.msra.mxu0 %v231
    %266 = vmatprep.subr.mxu0 0.0
    %267 = vmatpush1.msra.mxu0 %v232
    %268 = vmatprep.subr.mxu0 0.0
    %269 = vmatpush1.msra.mxu0 %v233
    %270 = vmatprep.subr.mxu0 0.0
    %271 = vmatpush1.msra.mxu0 %v234
    %272 = vmatprep.subr.mxu0 0.0
    %273 = vmatpush1.msra.mxu0 %v235
    %274 = vmatprep.subr.mxu0 0.0
    %275 = vmatpush1.msra.mxu0 %v236
    %276 = vmatprep.subr.mxu0 0.0
    %277 = vmatpush1.msra.mxu0 0.0
    %278 = vmatprep.subr.mxu0 0.0
    %279 = vmatpush1.msra.mxu0 0.0
    %280 = vmatprep.subr.mxu0 0.0
    %281 = vmatpush1.msra.mxu0 0.0
    %282 = vmatprep.subr.mxu0 0.0
    %283 = vmatpush1.msra.mxu0 0.0
    %284 = vmatprep.subr.mxu0 0.0
    %285 = vmatpush1.msra.mxu0 0.0
    %286 = vmatprep.subr.mxu0 0.0
    %287 = vmatpush1.msra.mxu0 0.0
    %288 = vmatprep.subr.mxu0 0.0
    %289 = vmatpush1.msra.mxu0 0.0
    %290 = vmatprep.subr.mxu0 0.0
    %291 = vmatpush1.msra.mxu0 0.0
    %292 = vmatprep.subr.mxu0 0.0
    %293 = vmatpush1.msra.mxu0 0.0
    %294 = vmatprep.subr.mxu0 0.0
    %295 = vmatpush1.msra.mxu0 0.0
    %296 = vmatprep.subr.mxu0 0.0
    %297 = vmatpush1.msra.mxu0 0.0
    %298 = vmatprep.subr.mxu0 0.0
    %299 = vmatpush1.msra.mxu0 0.0
    %300 = vmatprep.subr.mxu0 0.0
    %301 = vmatpush1.msra.mxu0 0.0
    %302 = vmatprep.subr.mxu0 0.0
    %303 = vmatpush1.msra.mxu0 0.0
    %304 = vmatprep.subr.mxu0 0.0
    %305 = vmatpush1.msra.mxu0 0.0
    %306 = vmatprep.subr.mxu0 0.0
    %307 = vmatpush1.msra.mxu0 0.0
    %308 = vmatprep.mubr.f32.mxu0 0.0
    %309 = vmatmul.mubr.f32.gmra.mrb[0].mxu0 %v220
    %v310 = vpop.f32.mrb[0].mxu0
    %v311 = vadd.f32 %v242, %v310
    %v312 = vpop.f32.mrb[0].mxu0
    %313 = vdwg.mxu0
    %vm314 = vcmask 31744
    %315 = vst.msk [vmem:[%s7] sm:$0xff] %vm314, %v311
    // Predicated region
    $region34: #{pallas_mlp.1} parent=1 // pred_check
      _
    $region35: #{pallas_mlp.1} parent=1 // pred_check_branch
      %317 = sbr.rel (0) target = $region37
    $region36: #{pallas_mlp.1} parent=1 // pred_region
      _
    $region37: #{pallas_mlp.1} parent=1 // pred_fallthru
      _
    // Predicated region
    $region38: #{pallas_mlp.1} parent=1 // pred_check
      _
    $region39: #{pallas_mlp.1} parent=1 // pred_check_branch
      %319 = sbr.rel (0) target = $region41
    $region40: #{pallas_mlp.1} parent=1 // pred_region
      _
    $region41: #{pallas_mlp.1} parent=1 // pred_fallthru
      _
    %320 = vsyncpa [#allocation3], 1

</llo_original>
